<compile_context>
chip_gen: v5e
topology: v5e:2x2
jax: 0.10.0
libtpu: 0.0.40
codegen_flags: <defaults>
</compile_context>

<pallas_src>
import functools

import jax
import jax.numpy as jnp
from jax import lax
from jax.experimental import pallas as pl
from jax.experimental.pallas import tpu as pltpu

# ---------------------------------------------------------------------------
# Problem sizes (small, consistent with the module's forward)
# ---------------------------------------------------------------------------
B = 1                     # polytope branch does (z - inputs).view(dim) -> batch 1
C_IMG, H_IMG, W_IMG = 4, 8, 8
DIM = C_IMG * H_IMG * W_IMG   # 256
HID = 128                 # basic_net hidden width
NCLS = 8                  # number of classes
M_CONSTR = 8              # number of polytope constraints (rows of A)

_MOSAIC = pltpu.CompilerParams(dimension_semantics=("arbitrary",))


def _full_spec(shape):
    nd = len(shape)
    return pl.BlockSpec(shape, lambda i, _nd=nd: (0,) * _nd)


# ---------------------------------------------------------------------------
# Kernel 1: basic_net forward  (attack=False path)
# ---------------------------------------------------------------------------
def _mlp_forward_kernel(x_ref, w1_ref, b1_ref, w2_ref, b2_ref, logits_ref):
    x = x_ref[...]
    pre1 = jnp.dot(x, w1_ref[...], preferred_element_type=jnp.float32) + b1_ref[...]
    h = jnp.maximum(pre1, 0.0)
    logits_ref[...] = (
        jnp.dot(h, w2_ref[...], preferred_element_type=jnp.float32) + b2_ref[...]
    )


@jax.jit
def mlp_forward(x_flat, w1, b1, w2, b2):
    bn = x_flat.shape[0]
    ncls = w2.shape[1]
    return pl.pallas_call(
        _mlp_forward_kernel,
        out_shape=jax.ShapeDtypeStruct((bn, ncls), jnp.float32),
        grid=(1,),
        in_specs=[
            _full_spec(x_flat.shape), _full_spec(w1.shape), _full_spec(b1.shape),
            _full_spec(w2.shape), _full_spec(b2.shape),
        ],
        out_specs=_full_spec((bn, ncls)),
        compiler_params=_MOSAIC,
    )(x_flat, w1, b1, w2, b2)


# ---------------------------------------------------------------------------
# Kernel 2: fused ADMM polytope attack (constraint == 'polytope', clip is None)
#   Each step:  x-update -> v -> z-update (max_z_iters analytic-grad steps)
#               -> u update;  finally logits = basic_net(inputs + z).
#   All state stays in VMEM/vregs for the whole attack.
# ---------------------------------------------------------------------------
def _admm_attack_kernel(x_in_ref, onehot_ref, w1_ref, b1_ref, w2_ref, b2_ref,
                        a_ref, bcol_ref,
                        logits_ref, z_ref, losses_ref,
                        *, num_steps, max_z_iters, rho, lr_z):
    x_in = x_in_ref[...]            # (1, dim)
    onehot = onehot_ref[...]        # (1, ncls)
    w1 = w1_ref[...]                # (dim, hid)  — resident for the whole attack
    b1 = b1_ref[...]
    w2 = w2_ref[...]                # (hid, ncls)
    b2 = b2_ref[...]
    a = a_ref[...]                  # (m, dim)
    bcol = bcol_ref[...]            # (m, 1)

    dim = x_in.shape[1]
    nloss = num_steps * max_z_iters
    penalty = jnp.float32(2000.0 * rho)
    lr = jnp.float32(lr_z)

    def mlp_fwd(xf):
        pre1 = jnp.dot(xf, w1, preferred_element_type=jnp.float32) + b1
        h = jnp.maximum(pre1, 0.0)
        logits = jnp.dot(h, w2, preferred_element_type=jnp.float32) + b2
        return pre1, logits

    def ce_and_grad(xf):
        # forward
        pre1, logits = mlp_fwd(xf)
        # stable softmax / sum-reduced cross-entropy
        mx = jnp.max(logits, axis=-1, keepdims=True)
        e = jnp.exp(logits - mx)
        s = jnp.sum(e, axis=-1, keepdims=True)
        p = e / s
        per_row = jnp.sum(onehot * ((jnp.log(s) + mx) - logits),
                          axis=-1, keepdims=True)
        ce = jnp.sum(per_row, axis=0, keepdims=True)                 # (1, 1)
        # analytic backward to the network input (torch.autograd.grad equiv.)
        dlogits = p - onehot                                         # (1, ncls)
        dh = lax.dot_general(dlogits, w2, (((1,), (1,)), ((), ())),  # · w2ᵀ
                             preferred_element_type=jnp.float32)
        dpre1 = jnp.where(pre1 > 0.0, dh, 0.0)
        dx = lax.dot_general(dpre1, w1, (((1,), (1,)), ((), ())),    # · w1ᵀ
                             preferred_element_type=jnp.float32)
        return ce, dx

    # constraint == 'polytope', clip is None, random_start=False:
    #   z = (z - inputs).view(dim) == 0
    z = jnp.zeros((1, dim), jnp.float32)
    u = jnp.zeros(a.shape, jnp.float32)
    lane_idx = lax.broadcasted_iota(jnp.int32, (1, nloss), 1)
    losses_row = jnp.zeros((1, nloss), jnp.float32)

    # num_steps / max_z_iters are tiny static ints -> fully unrolled & fused.
    for step in range(num_steps):
        # ADMM x-update: project (z - u) onto each half-space A_i x <= b_i
        diff = z - u                                                 # (m, dim)
        res = jnp.sum(a * diff, axis=1, keepdims=True) - bcol        # (m, 1)
        x = diff - jnp.maximum(res, 0.0) * a                         # (m, dim)
        v = (jnp.mean(x, axis=0, keepdims=True)
             + jnp.mean(u, axis=0, keepdims=True))                   # (1, dim)

        # z-update: ascend CE with quadratic penalty (delta = v.clone())
        delta = v
        for zi in range(max_z_iters):
            ce, grad_ce = ce_and_grad(x_in + delta)
            # d/ddelta of (-CE + 2000*rho/2 * ||delta - v||^2)
            grad = -grad_ce + penalty * (delta - v)
            delta = delta - lr * grad
            losses_row = jnp.where(lane_idx == (step * max_z_iters + zi),
                                   ce, losses_row)
        z = delta
        u = u + x - z

    # final adversarial logits = basic_net(inputs + z)
    _, adv_logits = mlp_fwd(x_in + z)
    logits_ref[...] = adv_logits
    z_ref[...] = z
    losses_ref[...] = losses_row


@functools.partial(jax.jit,
                   static_argnames=("num_steps", "max_z_iters", "rho", "lr_z"))
def admm_attack(inputs_flat, onehot, w1, b1, w2, b2, a_mat, b_col, *,
                num_steps, max_z_iters, rho, lr_z):
    bn, dim = inputs_flat.shape
    ncls = w2.shape[1]
    nloss = num_steps * max_z_iters
    kernel = functools.partial(
        _admm_attack_kernel,
        num_steps=num_steps, max_z_iters=max_z_iters,
        rho=float(rho), lr_z=float(lr_z))
    return pl.pallas_call(
        kernel,
        out_shape=(
            jax.ShapeDtypeStruct((bn, ncls), jnp.float32),   # adversarial logits
            jax.ShapeDtypeStruct((bn, dim), jnp.float32),    # final z (= delta)
            jax.ShapeDtypeStruct((1, nloss), jnp.float32),   # per z-iter CE values
        ),
        grid=(1,),
        in_specs=[
            _full_spec(inputs_flat.shape), _full_spec(onehot.shape),
            _full_spec(w1.shape), _full_spec(b1.shape),
            _full_spec(w2.shape), _full_spec(b2.shape),
            _full_spec(a_mat.shape), _full_spec(b_col.shape),
        ],
        out_specs=(
            _full_spec((bn, ncls)),
            _full_spec((bn, dim)),
            _full_spec((1, nloss)),
        ),
        compiler_params=_MOSAIC,
    )(inputs_flat, onehot, w1, b1, w2, b2, a_mat, b_col)


# ---------------------------------------------------------------------------
# ADMMModel port (all hot paths inside the single fused Pallas kernel)
# ---------------------------------------------------------------------------
class ADMMModelPallas:
    def __init__(self, net_weights, params):
        self.w1, self.b1, self.w2, self.b2 = net_weights
        self.params = params

    def basic_net(self, inputs):
        x_flat = inputs.reshape(inputs.shape[0], -1)
        return mlp_forward(x_flat, self.w1, self.b1, self.w2, self.b2)

    def forward(self, inputs, targets, attack=False, params=None):
        if not attack:
            return self.basic_net(inputs)
        if not params:
            params = self.params

        # TODO(synk): random_start path needs proj_ball_intsct / proj_polytope_batch
        # (external helpers not defined by the module); random_start=False only.
        # TODO(synk): only the constraint=='polytope', clip is None branch is
        # implemented; the 'balls' branch needs the external proj_ball helper.
        inputs_flat = inputs.reshape(-1, params['dim'])
        onehot = jax.nn.one_hot(targets, self.w2.shape[1], dtype=jnp.float32)

        a_mat = params['A']
        b_col = params['b'].reshape(-1, 1)

        logits_adv, _z, losses_dev = admm_attack(
            inputs_flat, onehot, self.w1, self.b1, self.w2, self.b2,
            a_mat, b_col,
            num_steps=params['num_steps'], max_z_iters=params['max_z_iters'],
            rho=float(params['rho']), lr_z=float(params['lr_z']))

        # Single device->host transfer for all per-iteration CE values
        # (replaces the per-iteration .cpu().item() of the reference).
        losses = [float(v) for v in jax.device_get(losses_dev).reshape(-1)]
        # TODO(synk): reference prints per-step diagnostics / z norms and calls
        # pdb.set_trace(); omitted.
        return logits_adv, losses


# ---------------------------------------------------------------------------
if __name__ == "__main__":
    key = jax.random.PRNGKey(0)
    k1, k2, k3, k4, k5, k6, k7 = jax.random.split(key, 7)

    # deterministic basic_net parameters
    w1 = jax.random.normal(k1, (DIM, HID), jnp.float32) * 0.05
    b1 = jax.random.normal(k2, (1, HID), jnp.float32) * 0.01
    w2 = jax.random.normal(k3, (HID, NCLS), jnp.float32) * 0.05
    b2 = jax.random.normal(k4, (1, NCLS), jnp.float32) * 0.01

    # deterministic polytope A x <= b
    A = jax.random.normal(k5, (M_CONSTR, DIM), jnp.float32)
    A = A / jnp.linalg.norm(A, axis=1, keepdims=True)
    b = jnp.abs(jax.random.normal(k6, (M_CONSTR,), jnp.float32)) * 0.1

    inputs = jax.random.uniform(k7, (B, C_IMG, H_IMG, W_IMG), jnp.float32)
    targets = jnp.array([3], dtype=jnp.int32)

    params = dict(
        dim=DIM, constraint='polytope', clip=None, random_start=False,
        A=A, b=b, AAT=None, norms=None, max_proj_iter=0,
        rho=1e-3, lr_z=0.05, max_z_iters=3, num_steps=2, device=None,
    )

    model = ADMMModelPallas((w1, b1, w2, b2), params)

    # attack=False branch: plain basic_net forward
    logits_clean = model.forward(inputs, targets, attack=False)
    jax.block_until_ready(logits_clean)

    # attack=True branch: fully fused ADMM adversarial loop
    logits_adv, losses = model.forward(inputs, targets, attack=True)
    jax.block_until_ready(logits_adv)

    assert logits_clean.shape == (B, NCLS)
    assert logits_adv.shape == (B, NCLS)
    assert len(losses) == params['num_steps'] * params['max_z_iters']
    assert bool(jnp.all(jnp.isfinite(logits_clean)))
    assert bool(jnp.all(jnp.isfinite(logits_adv)))
    assert all(l == l for l in losses)  # no NaNs
    print("KERNEL_OK")
</pallas_src>

<mosaic_0001>
module attributes {stable_mosaic.version = 11 : i64} {
  func.func @_mlp_forward_kernel(%arg0: i32, %arg1: memref<1x256xf32, #tpu.memory_space<vmem>>, %arg2: memref<256x128xf32, #tpu.memory_space<vmem>>, %arg3: memref<1x128xf32, #tpu.memory_space<vmem>>, %arg4: memref<128x8xf32, #tpu.memory_space<vmem>>, %arg5: memref<1x8xf32, #tpu.memory_space<vmem>>, %arg6: memref<1x8xf32, #tpu.memory_space<vmem>>) attributes {dimension_semantics = [#tpu.dimension_semantics<arbitrary>], iteration_bounds = array<i64: 1>, scalar_prefetch = 0 : i64, scratch_operands = 0 : i64, tpu.core_type = #tpu.core_type<tc>, window_params = [{pipeline_mode = #tpu.pipeline_mode<synchronous>, transform_indices = @transform_0, window_bounds = array<i64: 1, 256>}, {pipeline_mode = #tpu.pipeline_mode<synchronous>, transform_indices = @transform_1, window_bounds = array<i64: 256, 128>}, {pipeline_mode = #tpu.pipeline_mode<synchronous>, transform_indices = @transform_2, window_bounds = array<i64: 1, 128>}, {pipeline_mode = #tpu.pipeline_mode<synchronous>, transform_indices = @transform_3, window_bounds = array<i64: 128, 8>}, {pipeline_mode = #tpu.pipeline_mode<synchronous>, transform_indices = @transform_4, window_bounds = array<i64: 1, 8>}, {pipeline_mode = #tpu.pipeline_mode<synchronous>, transform_indices = @transform_5, window_bounds = array<i64: 1, 8>}]} {
    %c0 = arith.constant 0 : index
    %c0_0 = arith.constant 0 : index
    %0 = vector.load %arg1[%c0, %c0_0] : memref<1x256xf32, #tpu.memory_space<vmem>>, vector<1x256xf32>
    %c0_1 = arith.constant 0 : index
    %c0_2 = arith.constant 0 : index
    %1 = vector.load %arg2[%c0_1, %c0_2] : memref<256x128xf32, #tpu.memory_space<vmem>>, vector<256x128xf32>
    %cst = arith.constant dense<0.000000e+00> : vector<1x128xf32>
    %2 = tpu.matmul %0, %1, %cst {dimension_numbers = #tpu.dot_dimension_numbers<[1], [0], [0], [1], [0, 0, 1, 1], [], []>} : vector<1x256xf32>, vector<256x128xf32>, vector<1x128xf32> -> vector<1x128xf32>
    %c0_3 = arith.constant 0 : index
    %c0_4 = arith.constant 0 : index
    %3 = vector.load %arg3[%c0_3, %c0_4] : memref<1x128xf32, #tpu.memory_space<vmem>>, vector<1x128xf32>
    %4 = arith.addf %2, %3 : vector<1x128xf32>
    %cst_5 = arith.constant 0.000000e+00 : f32
    %5 = vector.broadcast %cst_5 : f32 to vector<1x128xf32>
    %6 = arith.maximumf %4, %5 : vector<1x128xf32>
    %c0_6 = arith.constant 0 : index
    %c0_7 = arith.constant 0 : index
    %7 = vector.load %arg4[%c0_6, %c0_7] : memref<128x8xf32, #tpu.memory_space<vmem>>, vector<128x8xf32>
    %cst_8 = arith.constant dense<0.000000e+00> : vector<1x8xf32>
    %8 = tpu.matmul %6, %7, %cst_8 {dimension_numbers = #tpu.dot_dimension_numbers<[1], [0], [0], [1], [0, 0, 1, 1], [], []>} : vector<1x128xf32>, vector<128x8xf32>, vector<1x8xf32> -> vector<1x8xf32>
    %c0_9 = arith.constant 0 : index
    %c0_10 = arith.constant 0 : index
    %9 = vector.load %arg5[%c0_9, %c0_10] : memref<1x8xf32, #tpu.memory_space<vmem>>, vector<1x8xf32>
    %10 = arith.addf %8, %9 : vector<1x8xf32>
    %c0_11 = arith.constant 0 : index
    %c0_12 = arith.constant 0 : index
    %11 = vector.load %arg6[%c0_11, %c0_12] : memref<1x8xf32, #tpu.memory_space<vmem>>, vector<1x8xf32>
    tpu.vector_store %arg6[%c0_11, %c0_12], %10 {strides = array<i32>} : memref<1x8xf32, #tpu.memory_space<vmem>>, vector<1x8xf32>,
    return
  }
  func.func @transform_0(%arg0: i32) -> (i32, i32) {
    %c0_i32 = arith.constant 0 : i32
    %c0_i32_0 = arith.constant 0 : i32
    %c0_i32_1 = arith.constant 0 : i32
    return %c0_i32, %c0_i32_0 : i32, i32
  }
  func.func @transform_1(%arg0: i32) -> (i32, i32) {
    %c0_i32 = arith.constant 0 : i32
    %c0_i32_0 = arith.constant 0 : i32
    %c0_i32_1 = arith.constant 0 : i32
    return %c0_i32, %c0_i32_0 : i32, i32
  }
  func.func @transform_2(%arg0: i32) -> (i32, i32) {
    %c0_i32 = arith.constant 0 : i32
    %c0_i32_0 = arith.constant 0 : i32
    %c0_i32_1 = arith.constant 0 : i32
    return %c0_i32, %c0_i32_0 : i32, i32
  }
  func.func @transform_3(%arg0: i32) -> (i32, i32) {
    %c0_i32 = arith.constant 0 : i32
    %c0_i32_0 = arith.constant 0 : i32
    %c0_i32_1 = arith.constant 0 : i32
    return %c0_i32, %c0_i32_0 : i32, i32
  }
  func.func @transform_4(%arg0: i32) -> (i32, i32) {
    %c0_i32 = arith.constant 0 : i32
    %c0_i32_0 = arith.constant 0 : i32
    %c0_i32_1 = arith.constant 0 : i32
    return %c0_i32, %c0_i32_0 : i32, i32
  }
  func.func @transform_5(%arg0: i32) -> (i32, i32) {
    %c0_i32 = arith.constant 0 : i32
    %c0_i32_0 = arith.constant 0 : i32
    %c0_i32_1 = arith.constant 0 : i32
    return %c0_i32, %c0_i32_0 : i32, i32
  }
}

</mosaic_0001>

<llo_original>
// kernel: mlp_forward.1
$region0: #{mlp_forward.1}
  #allocation0 [shape = 'u32[]', space=smem, size = 0x4, offset = 0x4, fixed_abs, tag = 'smem constant byte address 0x4 - core index']
  #allocation1 [shape = 'u32[72,128]{1,0:T(1,128)}', space=vmem, size = 0x9000, scoped, tag = 'internal scratch']
  %s0 = inlined_call_operand.vmem [shape: f32[1,256], index: 0, kind: input, shape index: {}]
  %s1 = inlined_call_operand.hbm [shape: f32[256,128], index: 1, kind: input, shape index: {}]
  %s2 = inlined_call_operand.vmem [shape: f32[1,128], index: 2, kind: input, shape index: {}]
  %s3 = inlined_call_operand.vmem [shape: f32[128,8], index: 3, kind: input, shape index: {}]
  %s4 = inlined_call_operand.vmem [shape: f32[1,8], index: 4, kind: input, shape index: {}]
  %s5 = inlined_call_operand.hbm [shape: f32[1,8], index: 5, kind: output, shape index: {}]
  %s6 = sld [smem:[#allocation0]]
  $region34: #{mlp_forward.1} parent=0
    _
  %s8 = ssub.s32 1, %s6
  %s9 = scalar_select 0, %s8, %s6
  $region1: #{mlp_forward.1} parent=0
    #allocation2 [shape = 'u8[131072]{0}', space=vmem, size = 0x20000, scoped, tag = 'input window, operand 1, single buffered']
    #allocation3 [shape = 's32[1]{0}', space=sflag, size = 0x4, scoped, tag = 'scoped memory for mlp_forward.1']
    #allocation4 [shape = 's32[1]{0}', space=sflag, size = 0x4, scoped, tag = 'scoped memory for mlp_forward.1']
    #allocation5 [shape = 'u8[512]{0}', space=vmem, size = 0x400, scoped, tag = 'output window, operand 0, single buffered']
    %10 = vsyncpa [#allocation3], 0
    %11 = vsyncpa [#allocation4], 0
    // Predicated region
    $region2: #{mlp_forward.1} parent=1 // pred_check
      _
    $region3: #{mlp_forward.1} parent=1 // pred_check_branch
      %13 = sbr.rel (0) target = $region5
    $region4: #{mlp_forward.1} parent=1 // pred_region
      _
    $region5: #{mlp_forward.1} parent=1 // pred_fallthru
      _
    // Predicated region
    $region6: #{mlp_forward.1} parent=1 // pred_check
      _
    $region7: #{mlp_forward.1} parent=1 // pred_check_branch
      %15 = sbr.rel (0) target = $region9
    $region8: #{mlp_forward.1} parent=1 // pred_region
      %17 = vsyncadd [#allocation3], 0
      %s18 = sshll.u32 %s1, 4
      %s19 = int_to_ptr.hbm [resolvable:$true] %s18
      %s20 = sshll.u32 [#allocation2], 4
      %s21 = int_to_ptr.vmem [resolvable:$true] %s20
      %26 = dma.hbm_to_vmem [thread:$0]  %s19, 4096, %s21, [#allocation3], 128, 128, 8
    $region9: #{mlp_forward.1} parent=1 // pred_fallthru
      _
    // Predicated region
    $region10: #{mlp_forward.1} parent=1 // pred_check
      _
    $region11: #{mlp_forward.1} parent=1 // pred_check_branch
      %28 = sbr.rel (0) target = $region13
    $region12: #{mlp_forward.1} parent=1 // pred_region
      _
    $region13: #{mlp_forward.1} parent=1 // pred_fallthru
      _
    // Predicated region
    $region14: #{mlp_forward.1} parent=1 // pred_check
      _
    $region15: #{mlp_forward.1} parent=1 // pred_check_branch
      %30 = sbr.rel (0) target = $region17
    $region16: #{mlp_forward.1} parent=1 // pred_region
      _
    $region17: #{mlp_forward.1} parent=1 // pred_fallthru
      _
    // Predicated region
    $region18: #{mlp_forward.1} parent=1 // pred_check
      _
    $region19: #{mlp_forward.1} parent=1 // pred_check_branch
      %32 = sbr.rel (0) target = $region21
    $region20: #{mlp_forward.1} parent=1 // pred_region
      _
    $region21: #{mlp_forward.1} parent=1 // pred_fallthru
      _
    // Predicated region
    $region22: #{mlp_forward.1} parent=1 // pred_check
      _
    $region23: #{mlp_forward.1} parent=1 // pred_check_branch
      %34 = sbr.rel (0) target = $region25
    $region24: #{mlp_forward.1} parent=1 // pred_region
      %36 = dma.done [#allocation3], 4096
    $region25: #{mlp_forward.1} parent=1 // pred_fallthru
      _
    %v37 = vld [vmem:[%s0] sm:$0x3]
    %v38 = vld [vmem:[#allocation2] sm:$0xff]
    %v39 = vld [vmem:[#allocation2 + $0x8] sm:$0xff]
    %v40 = vld [vmem:[#allocation2 + $0x10] sm:$0xff]
    %v41 = vld [vmem:[#allocation2 + $0x18] sm:$0xff]
    %v42 = vld [vmem:[#allocation2 + $0x20] sm:$0xff]
    %v43 = vld [vmem:[#allocation2 + $0x28] sm:$0xff]
    %v44 = vld [vmem:[#allocation2 + $0x30] sm:$0xff]
    %v45 = vld [vmem:[#allocation2 + $0x38] sm:$0xff]
    %v46 = vld [vmem:[#allocation2 + $0x40] sm:$0xff]
    %v47 = vld [vmem:[#allocation2 + $0x48] sm:$0xff]
    %v48 = vld [vmem:[#allocation2 + $0x50] sm:$0xff]
    %v49 = vld [vmem:[#allocation2 + $0x58] sm:$0xff]
    %v50 = vld [vmem:[#allocation2 + $0x60] sm:$0xff]
    %v51 = vld [vmem:[#allocation2 + $0x68] sm:$0xff]
    %v52 = vld [vmem:[#allocation2 + $0x70] sm:$0xff]
    %v53 = vld [vmem:[#allocation2 + $0x78] sm:$0xff]
    %v54 = vld [vmem:[#allocation2 + $0x80] sm:$0xff]
    %v55 = vld [vmem:[#allocation2 + $0x88] sm:$0xff]
    %v56 = vld [vmem:[#allocation2 + $0x90] sm:$0xff]
    %v57 = vld [vmem:[#allocation2 + $0x98] sm:$0xff]
    %v58 = vld [vmem:[#allocation2 + $0xa0] sm:$0xff]
    %v59 = vld [vmem:[#allocation2 + $0xa8] sm:$0xff]
    %v60 = vld [vmem:[#allocation2 + $0xb0] sm:$0xff]
    %v61 = vld [vmem:[#allocation2 + $0xb8] sm:$0xff]
    %v62 = vld [vmem:[#allocation2 + $0xc0] sm:$0xff]
    %v63 = vld [vmem:[#allocation2 + $0xc8] sm:$0xff]
    %v64 = vld [vmem:[#allocation2 + $0xd0] sm:$0xff]
    %v65 = vld [vmem:[#allocation2 + $0xd8] sm:$0xff]
    %v66 = vld [vmem:[#allocation2 + $0xe0] sm:$0xff]
    %v67 = vld [vmem:[#allocation2 + $0xe8] sm:$0xff]
    %v68 = vld [vmem:[#allocation2 + $0xf0] sm:$0xff]
    %v69 = vld [vmem:[#allocation2 + $0xf8] sm:$0xff]
    %v70 = vld [vmem:[%s2] sm:$0x1]
    %v72 = vperm.slane %v37, 0
    %v73 = vperm.slane %v37, 1
    %76 = vmatpush.msra.mxu0 %v53
    %77 = vmatpush.msra.mxu0 %v52
    %78 = vmatpush.msra.mxu0 %v51
    %79 = vmatpush.msra.mxu0 %v50
    %80 = vmatpush.msra.mxu0 %v49
    %81 = vmatpush.msra.mxu0 %v48
    %82 = vmatpush.msra.mxu0 %v47
    %83 = vmatpush.msra.mxu0 %v46
    %84 = vmatpush.msra.mxu0 %v45
    %85 = vmatpush.msra.mxu0 %v44
    %86 = vmatpush.msra.mxu0 %v43
    %87 = vmatpush.msra.mxu0 %v42
    %88 = vmatpush.msra.mxu0 %v41
    %89 = vmatpush.msra.mxu0 %v40
    %90 = vmatpush.msra.mxu0 %v39
    %91 = vmatpush.msra.mxu0 %v38
    %92 = vmatmul.f32.gmra.mxu0 %v72
    %v93 = vpop.f32.mrf.mxu0
    %v94 = vadd.f32 %v70, %v93
    %95 = vdwg.mxu0
    %96 = vmatpush.msra.mxu0 %v69
    %97 = vmatpush.msra.mxu0 %v68
    %98 = vmatpush.msra.mxu0 %v67
    %99 = vmatpush.msra.mxu0 %v66
    %100 = vmatpush.msra.mxu0 %v65
    %101 = vmatpush.msra.mxu0 %v64
    %102 = vmatpush.msra.mxu0 %v63
    %103 = vmatpush.msra.mxu0 %v62
    %104 = vmatpush.msra.mxu0 %v61
    %105 = vmatpush.msra.mxu0 %v60
    %106 = vmatpush.msra.mxu0 %v59
    %107 = vmatpush.msra.mxu0 %v58
    %108 = vmatpush.msra.mxu0 %v57
    %109 = vmatpush.msra.mxu0 %v56
    %110 = vmatpush.msra.mxu0 %v55
    %111 = vmatpush.msra.mxu0 %v54
    %112 = vmatmul.f32.gmra.mxu0 %v73
    %v113 = vpop.f32.mrf.mxu0
    %v114 = vadd.f32 %v94, %v113
    %115 = vdwg.mxu0
    %v116 = vmax.f32 %v114, 0.0
    %v117 = vld [vmem:[%s3] sm:$0xff]
    %v118 = vld [vmem:[%s3 + $0x8] sm:$0xff]
    %v119 = vld [vmem:[%s3 + $0x10] sm:$0xff]
    %v120 = vld [vmem:[%s3 + $0x18] sm:$0xff]
    %v121 = vld [vmem:[%s3 + $0x20] sm:$0xff]
    %v122 = vld [vmem:[%s3 + $0x28] sm:$0xff]
    %v123 = vld [vmem:[%s3 + $0x30] sm:$0xff]
    %v124 = vld [vmem:[%s3 + $0x38] sm:$0xff]
    %v125 = vld [vmem:[%s3 + $0x40] sm:$0xff]
    %v126 = vld [vmem:[%s3 + $0x48] sm:$0xff]
    %v127 = vld [vmem:[%s3 + $0x50] sm:$0xff]
    %v128 = vld [vmem:[%s3 + $0x58] sm:$0xff]
    %v129 = vld [vmem:[%s3 + $0x60] sm:$0xff]
    %v130 = vld [vmem:[%s3 + $0x68] sm:$0xff]
    %v131 = vld [vmem:[%s3 + $0x70] sm:$0xff]
    %v132 = vld [vmem:[%s3 + $0x78] sm:$0xff]
    %v133 = vld [vmem:[%s4] sm:$0x1]
    %134 = vmatpush.msra.mxu0 %v132
    %135 = vmatpush.msra.mxu0 %v131
    %136 = vmatpush.msra.mxu0 %v130
    %137 = vmatpush.msra.mxu0 %v129
    %138 = vmatpush.msra.mxu0 %v128
    %139 = vmatpush.msra.mxu0 %v127
    %140 = vmatpush.msra.mxu0 %v126
    %141 = vmatpush.msra.mxu0 %v125
    %142 = vmatpush.msra.mxu0 %v124
    %143 = vmatpush.msra.mxu0 %v123
    %144 = vmatpush.msra.mxu0 %v122
    %145 = vmatpush.msra.mxu0 %v121
    %146 = vmatpush.msra.mxu0 %v120
    %147 = vmatpush.msra.mxu0 %v119
    %148 = vmatpush.msra.mxu0 %v118
    %149 = vmatpush.msra.mxu0 %v117
    %150 = vmatmul.f32.gmra.mxu0 %v116
    %v151 = vpop.f32.mrf.mxu0
    %v152 = vadd.f32 %v133, %v151
    %153 = vdwg.mxu0
    %vm154 = vcmask 57344
    %155 = vst.msk [vmem:[#allocation5] sm:$0x1] %vm154, %v152
    // Predicated region
    $region26: #{mlp_forward.1} parent=1 // pred_check
      _
    $region27: #{mlp_forward.1} parent=1 // pred_check_branch
      %157 = sbr.rel (0) target = $region29
    $region28: #{mlp_forward.1} parent=1 // pred_region
      %159 = vsyncadd [#allocation4], 0
      %s161 = sshll.u32 [#allocation5], 4
      %s162 = int_to_ptr.vmem [resolvable:$true] %s161
      %s163 = sshll.u32 %s5, 4
      %s164 = int_to_ptr.hbm [resolvable:$true] %s163
      %166 = dma.vmem_to_hbm [thread:$0]  %s162, 16, %s164, [#allocation4]
    $region29: #{mlp_forward.1} parent=1 // pred_fallthru
      _
    // Predicated region
    $region30: #{mlp_forward.1} parent=1 // pred_check
      _
    $region31: #{mlp_forward.1} parent=1 // pred_check_branch
      %168 = sbr.rel (0) target = $region33
    $region32: #{mlp_forward.1} parent=1 // pred_region
      %170 = dma.done [#allocation4], 16
    $region33: #{mlp_forward.1} parent=1 // pred_fallthru
      _
    %171 = vsyncpa [#allocation3], 1
    %172 = vsyncpa [#allocation4], 1

</llo_original>
